<compile_context>
chip_gen: v5e
topology: v5e:2x2
jax: 0.10.0
libtpu: 0.0.40
codegen_flags: <defaults>
</compile_context>

<pallas_src>
import functools
import math

import jax
import jax.numpy as jnp
from jax.experimental import pallas as pl
from jax.experimental.pallas import tpu as pltpu


# ----------------------------- kernels ---------------------------------------


def _silu_f32(h):
    return h * jax.nn.sigmoid(h)


def _resident_kernel(x_ref, w1_ref, b1_ref, w2_ref, b2_ref, o_ref):
    """Whole MLP for one row tile; W1/b1/W2/b2 fully resident in VMEM."""
    h = jnp.dot(x_ref[...], w1_ref[...], preferred_element_type=jnp.float32)
    h = _silu_f32(h + b1_ref[...].astype(jnp.float32))
    out = jnp.dot(h.astype(w2_ref.dtype), w2_ref[...],
                  preferred_element_type=jnp.float32)
    o_ref[...] = (out + b2_ref[...].astype(jnp.float32)).astype(o_ref.dtype)


def _streamed_kernel(x_ref, w1_ref, b1_ref, w2_ref, b2_ref, o_ref, *scratch,
                     tn, recompute_h):
    """W2 streamed as (hidden, tn) column slabs.

    recompute_h=True : h recomputed on every column slab (no cross-j state),
                       so the j axis may be megacore-parallel.
    recompute_h=False: h computed once per row tile at j == 0 into a persistent
                       VMEM scratch; j must be sequential ("arbitrary").
    """

    def h_f32():
        h = jnp.dot(x_ref[...], w1_ref[...], preferred_element_type=jnp.float32)
        return _silu_f32(h + b1_ref[...].astype(jnp.float32))

    if recompute_h:
        h_val = h_f32().astype(w2_ref.dtype)
    else:
        h_ref = scratch[0]

        @pl.when(pl.program_id(1) == 0)
        def _():
            h_ref[...] = h_f32().astype(h_ref.dtype)

        h_val = h_ref[...]

    # b2 is resident (1, hidden); slice the current tn window in-kernel.
    start = pl.multiple_of(pl.program_id(1) * tn, tn)
    b2 = b2_ref[:, pl.ds(start, tn)].astype(jnp.float32)

    out = jnp.dot(h_val, w2_ref[...], preferred_element_type=jnp.float32)
    o_ref[...] = (out + b2).astype(o_ref.dtype)


# ----------------------------- helpers ----------------------------------------


def _round_up(a: int, m: int) -> int:
    return (a + m - 1) // m * m


def _pick_tn(hidden: int, tn: int) -> int:
    """Largest lane-dense column-slab width that divides `hidden`."""
    for cand in (tn, 1024, 768, 512, 384, 256, 128):
        if 0 < cand <= hidden and hidden % cand == 0:
            return cand
    return hidden  # small / odd hidden: single full-width slab


def _device_kind() -> str:
    try:
        return jax.devices()[0].device_kind.lower()
    except Exception:
        return ""


def _vmem_budget_bytes(kind: str) -> int:
    phys = None
    try:
        phys = int(pltpu.get_tpu_info().vmem_capacity_bytes)
    except Exception:
        phys = None
    if not phys:
        phys = (64 << 20) if ("v7" in kind or "7x" in kind) else (128 << 20)
    # Leave headroom for compiler-internal scratch (never the full 64 MiB).
    return phys - max(phys // 8, 8 << 20)


def _nbytes(shape, dt) -> int:
    return math.prod(shape) * jnp.dtype(dt).itemsize


def _spec(shape, index_map, pipeline_mode=None):
    if pipeline_mode is None:
        return pl.BlockSpec(shape, index_map)
    return pl.BlockSpec(shape, index_map, pipeline_mode=pipeline_mode)


# ----------------------------- wrapper ----------------------------------------


def mlp_embedder(x, w1, b1, w2, b2, *, tm=None, tn=None,
                 compute_dtype=jnp.bfloat16, resident_w2=None,
                 vmem_limit_bytes=None):
    """MLPEmbedder forward: out = silu(x @ w1 + b1) @ w2 + b2.

    x : (B, in_dim); w1: (in_dim, hidden); b1: (hidden,);
    w2: (hidden, hidden); b2: (hidden,).   Returns (B, hidden) in x.dtype.
    x/W1/W2 run in `compute_dtype` (bf16 by default) with f32 accumulation;
    biases are added in f32.  Pass compute_dtype=jnp.float32 (or None) for a
    full-precision path.
    """
    B, in_dim = x.shape
    hidden = w1.shape[1]
    out_dtype = x.dtype

    if compute_dtype is not None:
        x = x.astype(compute_dtype)
        w1 = w1.astype(compute_dtype)
        w2 = w2.astype(compute_dtype)
    # biases stay f32 (or their given dtype) and are added in f32 in-kernel.

    kind = _device_kind()
    is_v5 = "v5" in kind
    is_v6 = "v6" in kind
    if tm is None:
        tm = 1024 if is_v6 else 512         # bigger row tile => more W2 reuse
    if tn is None:
        tn = 512 if is_v5 else 1024         # wide lane-dense W2 slabs

    sub = 16 if x.dtype == jnp.bfloat16 else 8
    tm_eff = max(sub, min(_round_up(tm, sub), _round_up(B, sub)))
    B_pad = _round_up(B, tm_eff)
    if B_pad != B:
        x = jnp.pad(x, ((0, B_pad - B), (0, 0)))   # zero rows, sliced off below
    rows = B_pad // tm_eff

    tn_eff = _pick_tn(hidden, tn)
    cols = hidden // tn_eff

    b1_2d = b1.reshape(1, hidden)
    b2_2d = b2.reshape(1, hidden)

    budget = _vmem_budget_bytes(kind)

    # Conservative VMEM working sets (all pipelined inputs double-buffered so
    # even the non-Buffered(1) fallback fits).
    need_res = (2 * _nbytes((tm_eff, in_dim), x.dtype)
                + 2 * _nbytes((in_dim, hidden), w1.dtype)
                + 2 * _nbytes((1, hidden), b1_2d.dtype)
                + 2 * _nbytes((hidden, hidden), w2.dtype)
                + 2 * _nbytes((1, hidden), b2_2d.dtype)
                + 2 * _nbytes((tm_eff, hidden), out_dtype)
                + _nbytes((tm_eff, hidden), jnp.float32)    # f32 h temp
                + _nbytes((tm_eff, hidden), w2.dtype))      # cast temp
    need_stream = (2 * _nbytes((tm_eff, in_dim), x.dtype)
                   + 2 * _nbytes((in_dim, hidden), w1.dtype)
                   + 2 * _nbytes((1, hidden), b1_2d.dtype)
                   + 2 * _nbytes((hidden, tn_eff), w2.dtype)
                   + _nbytes((1, hidden), b2_2d.dtype)       # b2 resident
                   + 2 * _nbytes((tm_eff, tn_eff), out_dtype)
                   + _nbytes((tm_eff, hidden), w2.dtype)     # h scratch
                   + _nbytes((tm_eff, hidden), jnp.float32)) # f32 h temp

    if resident_w2 is None:
        resident_w2 = (int(need_res * 1.2) + (2 << 20)) <= budget

    need = need_res if resident_w2 else need_stream
    if vmem_limit_bytes is None:
        limit = min(budget, int(need * 1.2) + (2 << 20))
    else:
        limit = int(vmem_limit_bytes)

    itemsize = lambda dt: jnp.dtype(dt).itemsize
    cost = pl.CostEstimate(
        flops=2 * B_pad * hidden * (in_dim + hidden),
        transcendentals=B_pad * hidden,                      # sigmoid
        bytes_accessed=(B_pad * in_dim * itemsize(x.dtype)
                        + in_dim * hidden * itemsize(w1.dtype)
                        + hidden * itemsize(b1_2d.dtype)
                        + hidden * hidden * itemsize(w2.dtype)
                        + hidden * itemsize(b2_2d.dtype)
                        + B_pad * hidden * itemsize(out_dtype)))

    def call(single_buffer_invariants):
        const_mode = pl.Buffered(1) if single_buffer_invariants else None
        if resident_w2:
            in_specs = [
                _spec((tm_eff, in_dim), lambda i: (i, 0)),                  # x
                _spec((in_dim, hidden), lambda i: (0, 0), const_mode),      # W1
                _spec((1, hidden), lambda i: (0, 0), const_mode),           # b1
                _spec((hidden, hidden), lambda i: (0, 0), const_mode),      # W2
                _spec((1, hidden), lambda i: (0, 0), const_mode),           # b2
            ]
            out_specs = pl.BlockSpec((tm_eff, hidden), lambda i: (i, 0))
            grid = (rows,)
            scratch = []
            kernel = _resident_kernel
            dims = ("parallel",)
        else:
            recompute_h = (rows == 1) and (cols > 1)
            in_specs = [
                _spec((tm_eff, in_dim), lambda i, j: (i, 0)),               # x
                _spec((in_dim, hidden), lambda i, j: (0, 0), const_mode),   # W1
                _spec((1, hidden), lambda i, j: (0, 0), const_mode),        # b1
                _spec((hidden, tn_eff), lambda i, j: (0, j)),               # W2 slab
                _spec((1, hidden), lambda i, j: (0, 0), const_mode),        # b2
            ]
            out_specs = pl.BlockSpec((tm_eff, tn_eff), lambda i, j: (i, j))
            grid = (rows, cols)
            scratch = ([] if recompute_h
                       else [pltpu.VMEM((tm_eff, hidden), w2.dtype)])
            kernel = functools.partial(_streamed_kernel, tn=tn_eff,
                                       recompute_h=recompute_h)
            dims = ("parallel", "parallel" if recompute_h else "arbitrary")

        return pl.pallas_call(
            kernel,
            out_shape=jax.ShapeDtypeStruct((B_pad, hidden), out_dtype),
            grid_spec=pltpu.PrefetchScalarGridSpec(
                num_scalar_prefetch=0,
                grid=grid,
                in_specs=in_specs,
                out_specs=out_specs,
                scratch_shapes=scratch),
            compiler_params=pltpu.CompilerParams(
                dimension_semantics=dims,
                vmem_limit_bytes=int(limit)),
            cost_estimate=cost,
        )(x, w1, b1_2d, w2, b2_2d)

    try:
        out = call(single_buffer_invariants=True)
    except Exception:
        # pl.Buffered(1) on grid-invariant inputs is purely a VMEM saving; fall
        # back to default double-buffering if this jax/Mosaic rejects it.
        out = call(single_buffer_invariants=False)

    return out[:B] if B_pad != B else out


def reference(x, w1, b1, w2, b2):
    h = x @ w1 + b1
    h = h * jax.nn.sigmoid(h)
    return h @ w2 + b2


if __name__ == "__main__":
    # Small but lane-dense shapes (feature dims multiples of 128); batch=12 is
    # deliberately NOT a multiple of the row tile to exercise padding.
    B, in_dim, hidden = 12, 128, 256
    key = jax.random.PRNGKey(0)
    kx, kw1, kb1, kw2, kb2, kx2 = jax.random.split(key, 6)

    x = jax.random.normal(kx, (B, in_dim), dtype=jnp.float32)

    # torch Linear default init: U(-1/sqrt(fan_in), 1/sqrt(fan_in)); weights
    # stored pre-transposed to (in_features, out_features).
    bound1 = 1.0 / (in_dim ** 0.5)
    bound2 = 1.0 / (hidden ** 0.5)
    w1 = jax.random.uniform(kw1, (in_dim, hidden), minval=-bound1, maxval=bound1,
                            dtype=jnp.float32)
    b1 = jax.random.uniform(kb1, (hidden,), minval=-bound1, maxval=bound1,
                            dtype=jnp.float32)
    w2 = jax.random.uniform(kw2, (hidden, hidden), minval=-bound2, maxval=bound2,
                            dtype=jnp.float32)
    b2 = jax.random.uniform(kb2, (hidden,), minval=-bound2, maxval=bound2,
                            dtype=jnp.float32)

    ref = reference(x, w1, b1, w2, b2)

    # 1) f32 path, auto variant (resident-W2 at these shapes): tight check.
    out_f32 = jax.block_until_ready(
        mlp_embedder(x, w1, b1, w2, b2, compute_dtype=jnp.float32))
    assert out_f32.shape == (B, hidden)
    assert jnp.allclose(out_f32, ref, atol=1e-4, rtol=1e-4), "f32 mismatch"

    # 2) default bf16 mixed-precision path (f32 accumulate): smoke test.
    out_bf16 = jax.block_until_ready(mlp_embedder(x, w1, b1, w2, b2))
    assert out_bf16.shape == (B, hidden)
    assert bool(jnp.all(jnp.isfinite(out_bf16.astype(jnp.float32))))
    assert float(jnp.max(jnp.abs(out_bf16.astype(jnp.float32) - ref))) < 0.5

    # 3) streamed-W2 path, single row tile -> recompute-h / parallel-j variant.
    out_s1 = jax.block_until_ready(
        mlp_embedder(x, w1, b1, w2, b2, compute_dtype=jnp.float32,
                     resident_w2=False, tn=128))
    assert jnp.allclose(out_s1, ref, atol=1e-4, rtol=1e-4), "streamed-1 mismatch"

    # 4) streamed-W2 path, multiple row tiles -> persistent-h (j==0 guard) path.
    B2 = 40
    x2 = jax.random.normal(kx2, (B2, in_dim), dtype=jnp.float32)
    ref2 = reference(x2, w1, b1, w2, b2)
    out_s2 = jax.block_until_ready(
        mlp_embedder(x2, w1, b1, w2, b2, compute_dtype=jnp.float32,
                     resident_w2=False, tm=16, tn=128))
    assert out_s2.shape == (B2, hidden)
    assert jnp.allclose(out_s2, ref2, atol=1e-4, rtol=1e-4), "streamed-2 mismatch"

    print("KERNEL_OK")
</pallas_src>

<mosaic_0001>
module attributes {stable_mosaic.version = 11 : i64} {
  func.func @_resident_kernel(%arg0: i32, %arg1: memref<16x128xf32, #tpu.memory_space<vmem>>, %arg2: memref<128x256xf32, #tpu.memory_space<vmem>>, %arg3: memref<1x256xf32, #tpu.memory_space<vmem>>, %arg4: memref<256x256xf32, #tpu.memory_space<vmem>>, %arg5: memref<1x256xf32, #tpu.memory_space<vmem>>, %arg6: memref<16x256xf32, #tpu.memory_space<vmem>>) attributes {dimension_semantics = [#tpu.dimension_semantics<parallel>], iteration_bounds = array<i64: 1>, scalar_prefetch = 0 : i64, scratch_operands = 0 : i64, tpu.core_type = #tpu.core_type<tc>, window_params = [{transform_indices = @transform_0, window_bounds = array<i64: 16, 128>}, {pipeline_mode = #tpu.pipeline_mode<synchronous>, transform_indices = @transform_1, window_bounds = array<i64: 128, 256>}, {pipeline_mode = #tpu.pipeline_mode<synchronous>, transform_indices = @transform_2, window_bounds = array<i64: 1, 256>}, {pipeline_mode = #tpu.pipeline_mode<synchronous>, transform_indices = @transform_3, window_bounds = array<i64: 256, 256>}, {pipeline_mode = #tpu.pipeline_mode<synchronous>, transform_indices = @transform_4, window_bounds = array<i64: 1, 256>}, {transform_indices = @transform_5, window_bounds = array<i64: 16, 256>}]} {
    %c0 = arith.constant 0 : index
    %c0_0 = arith.constant 0 : index
    %0 = vector.load %arg1[%c0, %c0_0] : memref<16x128xf32, #tpu.memory_space<vmem>>, vector<16x128xf32>
    %c0_1 = arith.constant 0 : index
    %c0_2 = arith.constant 0 : index
    %1 = vector.load %arg2[%c0_1, %c0_2] : memref<128x256xf32, #tpu.memory_space<vmem>>, vector<128x256xf32>
    %cst = arith.constant dense<0.000000e+00> : vector<16x256xf32>
    %2 = tpu.matmul %0, %1, %cst {dimension_numbers = #tpu.dot_dimension_numbers<[1], [0], [0], [1], [0, 0, 1, 1], [], []>} : vector<16x128xf32>, vector<128x256xf32>, vector<16x256xf32> -> vector<16x256xf32>
    %c0_3 = arith.constant 0 : index
    %c0_4 = arith.constant 0 : index
    %3 = vector.load %arg3[%c0_3, %c0_4] : memref<1x256xf32, #tpu.memory_space<vmem>>, vector<1x256xf32>
    %4 = vector.broadcast %3 : vector<1x256xf32> to vector<16x256xf32>
    %5 = arith.addf %2, %4 : vector<16x256xf32>
    %6 = arith.negf %5 : vector<16x256xf32>
    %7 = math.exp %6 : vector<16x256xf32>
    %cst_5 = arith.constant 1.000000e+00 : f32
    %8 = vector.broadcast %cst_5 : f32 to vector<16x256xf32>
    %9 = arith.addf %8, %7 : vector<16x256xf32>
    %10 = arith.divf %8, %9 : vector<16x256xf32>
    %11 = arith.mulf %5, %10 : vector<16x256xf32>
    %c0_6 = arith.constant 0 : index
    %c0_7 = arith.constant 0 : index
    %12 = vector.load %arg4[%c0_6, %c0_7] : memref<256x256xf32, #tpu.memory_space<vmem>>, vector<256x256xf32>
    %cst_8 = arith.constant dense<0.000000e+00> : vector<16x256xf32>
    %13 = tpu.matmul %11, %12, %cst_8 {dimension_numbers = #tpu.dot_dimension_numbers<[1], [0], [0], [1], [0, 0, 1, 1], [], []>} : vector<16x256xf32>, vector<256x256xf32>, vector<16x256xf32> -> vector<16x256xf32>
    %c0_9 = arith.constant 0 : index
    %c0_10 = arith.constant 0 : index
    %14 = vector.load %arg5[%c0_9, %c0_10] : memref<1x256xf32, #tpu.memory_space<vmem>>, vector<1x256xf32>
    %15 = vector.broadcast %14 : vector<1x256xf32> to vector<16x256xf32>
    %16 = arith.addf %13, %15 : vector<16x256xf32>
    %c0_11 = arith.constant 0 : index
    %c0_12 = arith.constant 0 : index
    %17 = vector.load %arg6[%c0_11, %c0_12] : memref<16x256xf32, #tpu.memory_space<vmem>>, vector<16x256xf32>
    tpu.vector_store %arg6[%c0_11, %c0_12], %16 {strides = array<i32>} : memref<16x256xf32, #tpu.memory_space<vmem>>, vector<16x256xf32>,
    return
  }
  func.func @transform_0(%arg0: i32) -> (i32, i32) {
    %c0_i32 = arith.constant 0 : i32
    %c0_i32_0 = arith.constant 0 : i32
    return %arg0, %c0_i32 : i32, i32
  }
  func.func @transform_1(%arg0: i32) -> (i32, i32) {
    %c0_i32 = arith.constant 0 : i32
    %c0_i32_0 = arith.constant 0 : i32
    %c0_i32_1 = arith.constant 0 : i32
    return %c0_i32, %c0_i32_0 : i32, i32
  }
  func.func @transform_2(%arg0: i32) -> (i32, i32) {
    %c0_i32 = arith.constant 0 : i32
    %c0_i32_0 = arith.constant 0 : i32
    %c0_i32_1 = arith.constant 0 : i32
    return %c0_i32, %c0_i32_0 : i32, i32
  }
  func.func @transform_3(%arg0: i32) -> (i32, i32) {
    %c0_i32 = arith.constant 0 : i32
    %c0_i32_0 = arith.constant 0 : i32
    %c0_i32_1 = arith.constant 0 : i32
    return %c0_i32, %c0_i32_0 : i32, i32
  }
  func.func @transform_4(%arg0: i32) -> (i32, i32) {
    %c0_i32 = arith.constant 0 : i32
    %c0_i32_0 = arith.constant 0 : i32
    %c0_i32_1 = arith.constant 0 : i32
    return %c0_i32, %c0_i32_0 : i32, i32
  }
  func.func @transform_5(%arg0: i32) -> (i32, i32) {
    %c0_i32 = arith.constant 0 : i32
    %c0_i32_0 = arith.constant 0 : i32
    return %arg0, %c0_i32 : i32, i32
  }
}

module attributes {stable_mosaic.version = 11 : i64} {
  func.func @_resident_kernel(%arg0: i32, %arg1: memref<16x128xf32, #tpu.memory_space<vmem>>, %arg2: memref<128x256xf32, #tpu.memory_space<vmem>>, %arg3: memref<1x256xf32, #tpu.memory_space<vmem>>, %arg4: memref<256x256xf32, #tpu.memory_space<vmem>>, %arg5: memref<1x256xf32, #tpu.memory_space<vmem>>, %arg6: memref<16x256xf32, #tpu.memory_space<vmem>>) attributes {dimension_semantics = [#tpu.dimension_semantics<parallel>], iteration_bounds = array<i64: 1>, scalar_prefetch = 0 : i64, scratch_operands = 0 : i64, tpu.core_type = #tpu.core_type<tc>, window_params = [{transform_indices = @transform_0, window_bounds = array<i64: 16, 128>}, {pipeline_mode = #tpu.pipeline_mode<synchronous>, transform_indices = @transform_1, window_bounds = array<i64: 128, 256>}, {pipeline_mode = #tpu.pipeline_mode<synchronous>, transform_indices = @transform_2, window_bounds = array<i64: 1, 256>}, {pipeline_mode = #tpu.pipeline_mode<synchronous>, transform_indices = @transform_3, window_bounds = array<i64: 256, 256>}, {pipeline_mode = #tpu.pipeline_mode<synchronous>, transform_indices = @transform_4, window_bounds = array<i64: 1, 256>}, {transform_indices = @transform_5, window_bounds = array<i64: 16, 256>}]} {
    %c0 = arith.constant 0 : index
    %c0_0 = arith.constant 0 : index
    %0 = vector.load %arg1[%c0, %c0_0] : memref<16x128xf32, #tpu.memory_space<vmem>>, vector<16x128xf32>
    %c0_1 = arith.constant 0 : index
    %c0_2 = arith.constant 0 : index
    %1 = vector.load %arg2[%c0_1, %c0_2] : memref<128x256xf32, #tpu.memory_space<vmem>>, vector<128x256xf32>
    %cst = arith.constant dense<0.000000e+00> : vector<16x256xf32>
    %2 = tpu.matmul %0, %1, %cst {dimension_numbers = #tpu.dot_dimension_numbers<[1], [0], [0], [1], [0, 0, 1, 1], [], []>} : vector<16x128xf32>, vector<128x256xf32>, vector<16x256xf32> -> vector<16x256xf32>
    %c0_3 = arith.constant 0 : index
    %c0_4 = arith.constant 0 : index
    %3 = vector.load %arg3[%c0_3, %c0_4] : memref<1x256xf32, #tpu.memory_space<vmem>>, vector<1x256xf32>
    %4 = vector.broadcast %3 : vector<1x256xf32> to vector<16x256xf32>
    %5 = arith.addf %2, %4 : vector<16x256xf32>
    %6 = arith.negf %5 : vector<16x256xf32>
    %7 = math.exp %6 : vector<16x256xf32>
    %cst_5 = arith.constant 1.000000e+00 : f32
    %8 = vector.broadcast %cst_5 : f32 to vector<16x256xf32>
    %9 = arith.addf %8, %7 : vector<16x256xf32>
    %10 = arith.divf %8, %9 : vector<16x256xf32>
    %11 = arith.mulf %5, %10 : vector<16x256xf32>
    %c0_6 = arith.constant 0 : index
    %c0_7 = arith.constant 0 : index
    %12 = vector.load %arg4[%c0_6, %c0_7] : memref<256x256xf32, #tpu.memory_space<vmem>>, vector<256x256xf32>
    %cst_8 = arith.constant dense<0.000000e+00> : vector<16x256xf32>
    %13 = tpu.matmul %11, %12, %cst_8 {dimension_numbers = #tpu.dot_dimension_numbers<[1], [0], [0], [1], [0, 0, 1, 1], [], []>} : vector<16x256xf32>, vector<256x256xf32>, vector<16x256xf32> -> vector<16x256xf32>
    %c0_9 = arith.constant 0 : index
    %c0_10 = arith.constant 0 : index
    %14 = vector.load %arg5[%c0_9, %c0_10] : memref<1x256xf32, #tpu.memory_space<vmem>>, vector<1x256xf32>
    %15 = vector.broadcast %14 : vector<1x256xf32> to vector<16x256xf32>
    %16 = arith.addf %13, %15 : vector<16x256xf32>
    %c0_11 = arith.constant 0 : index
    %c0_12 = arith.constant 0 : index
    %17 = vector.load %arg6[%c0_11, %c0_12] : memref<16x256xf32, #tpu.memory_space<vmem>>, vector<16x256xf32>
    tpu.vector_store %arg6[%c0_11, %c0_12], %16 {strides = array<i32>} : memref<16x256xf32, #tpu.memory_space<vmem>>, vector<16x256xf32>,
    return
  }
  func.func @transform_0(%arg0: i32) -> (i32, i32) {
    %c0_i32 = arith.constant 0 : i32
    %c0_i32_0 = arith.constant 0 : i32
    return %arg0, %c0_i32 : i32, i32
  }
  func.func @transform_1(%arg0: i32) -> (i32, i32) {
    %c0_i32 = arith.constant 0 : i32
    %c0_i32_0 = arith.constant 0 : i32
    %c0_i32_1 = arith.constant 0 : i32
    return %c0_i32, %c0_i32_0 : i32, i32
  }
  func.func @transform_2(%arg0: i32) -> (i32, i32) {
    %c0_i32 = arith.constant 0 : i32
    %c0_i32_0 = arith.constant 0 : i32
    %c0_i32_1 = arith.constant 0 : i32
    return %c0_i32, %c0_i32_0 : i32, i32
  }
  func.func @transform_3(%arg0: i32) -> (i32, i32) {
    %c0_i32 = arith.constant 0 : i32
    %c0_i32_0 = arith.constant 0 : i32
    %c0_i32_1 = arith.constant 0 : i32
    return %c0_i32, %c0_i32_0 : i32, i32
  }
  func.func @transform_4(%arg0: i32) -> (i32, i32) {
    %c0_i32 = arith.constant 0 : i32
    %c0_i32_0 = arith.constant 0 : i32
    %c0_i32_1 = arith.constant 0 : i32
    return %c0_i32, %c0_i32_0 : i32, i32
  }
  func.func @transform_5(%arg0: i32) -> (i32, i32) {
    %c0_i32 = arith.constant 0 : i32
    %c0_i32_0 = arith.constant 0 : i32
    return %arg0, %c0_i32 : i32, i32
  }
}

</mosaic_0001>

<llo_original>
// kernel: tpu_custom_call.1
$region0: #{tpu_custom_call.1}
  #allocation0 [shape = 'u32[]', space=smem, size = 0x4, offset = 0x4, fixed_abs, tag = 'smem constant byte address 0x4 - core index']
  #allocation1 [shape = 'u32[72,128]{1,0:T(1,128)}', space=vmem, size = 0x9000, scoped, tag = 'internal scratch']
  %s0 = inlined_call_operand.hbm [shape: f32[16,128], index: 0, kind: input, shape index: {}]
  %s1 = inlined_call_operand.hbm [shape: f32[128,256], index: 1, kind: input, shape index: {}]
  %s2 = inlined_call_operand.hbm [shape: f32[1,256], index: 2, kind: input, shape index: {}]
  %s3 = inlined_call_operand.hbm [shape: f32[256,256], index: 3, kind: input, shape index: {}]
  %s4 = inlined_call_operand.vmem [shape: f32[1,256], index: 4, kind: input, shape index: {}]
  %s5 = inlined_call_operand.hbm [shape: f32[16,256], index: 5, kind: output, shape index: {}]
  %s6 = sld [smem:[#allocation0]]
  $region46: #{tpu_custom_call.1} parent=0
    _
  %s8 = ssub.s32 1, %s6
  %s9 = scalar_select 0, %s8, %s6
  $region1: #{tpu_custom_call.1} parent=0
    #allocation2 [shape = 'u8[8192]{0}', space=vmem, size = 0x2000, scoped, tag = 'input window, operand 0, single buffered']
    #allocation3 [shape = 's32[1]{0}', space=sflag, size = 0x4, scoped, tag = 'scoped memory for tpu_custom_call.1']
    #allocation4 [shape = 's32[1]{0}', space=sflag, size = 0x4, scoped, tag = 'scoped memory for tpu_custom_call.1']
    #allocation5 [shape = 'u8[131072]{0}', space=vmem, size = 0x20000, scoped, tag = 'input window, operand 1, single buffered']
    #allocation6 [shape = 's32[1]{0}', space=sflag, size = 0x4, scoped, tag = 'scoped memory for tpu_custom_call.1']
    #allocation7 [shape = 'u8[1024]{0}', space=vmem, size = 0x400, scoped, tag = 'input window, operand 2, single buffered']
    #allocation8 [shape = 'u8[262144]{0}', space=vmem, size = 0x40000, scoped, tag = 'input window, operand 3, single buffered']
    #allocation9 [shape = 's32[1]{0}', space=sflag, size = 0x4, scoped, tag = 'scoped memory for tpu_custom_call.1']
    #allocation10 [shape = 'u8[16384]{0}', space=vmem, size = 0x4000, scoped, tag = 'output window, operand 0, single buffered']
    %10 = vsyncpa [#allocation3], 0
    %11 = vsyncpa [#allocation6], 0
    %12 = vsyncpa [#allocation9], 0
    %13 = vsyncpa [#allocation4], 0
    // Predicated region
    $region2: #{tpu_custom_call.1} parent=1 // pred_check
      _
    $region3: #{tpu_custom_call.1} parent=1 // pred_check_branch
      %15 = sbr.rel (0) target = $region5
    $region4: #{tpu_custom_call.1} parent=1 // pred_region
      %17 = vsyncadd [#allocation3], 0
      %s18 = sshll.u32 %s0, 4
      %s19 = int_to_ptr.hbm [resolvable:$true] %s18
      %s20 = sshll.u32 [#allocation2], 4
      %s21 = int_to_ptr.vmem [resolvable:$true] %s20
      %26 = dma.hbm_to_vmem [thread:$0]  %s19, 256, %s21, [#allocation3], 128, 128, 8
    $region5: #{tpu_custom_call.1} parent=1 // pred_fallthru
      _
    // Predicated region
    $region6: #{tpu_custom_call.1} parent=1 // pred_check
      _
    $region7: #{tpu_custom_call.1} parent=1 // pred_check_branch
      %28 = sbr.rel (0) target = $region9
    $region8: #{tpu_custom_call.1} parent=1 // pred_region
      %30 = vsyncadd [#allocation6], 0
      %s31 = sshll.u32 %s1, 4
      %s32 = int_to_ptr.hbm [resolvable:$true] %s31
      %s33 = sshll.u32 [#allocation5], 4
      %s34 = int_to_ptr.vmem [resolvable:$true] %s33
      %39 = dma.hbm_to_vmem [thread:$0]  %s32, 4096, %s34, [#allocation6], 256, 256, 16
    $region9: #{tpu_custom_call.1} parent=1 // pred_fallthru
      _
    // Predicated region
    $region10: #{tpu_custom_call.1} parent=1 // pred_check
      _
    $region11: #{tpu_custom_call.1} parent=1 // pred_check_branch
      %41 = sbr.rel (0) target = $region13
    $region12: #{tpu_custom_call.1} parent=1 // pred_region
      %43 = vsyncadd [#allocation6], 0
      %s45 = sshll.u32 %s2, 4
      %s46 = int_to_ptr.hbm [resolvable:$true] %s45
      %s47 = sshll.u32 [#allocation7], 4
      %s48 = int_to_ptr.vmem [resolvable:$true] %s47
      %50 = dma.hbm_to_vmem [thread:$0]  %s46, 32, %s48, [#allocation6]
    $region13: #{tpu_custom_call.1} parent=1 // pred_fallthru
      _
    // Predicated region
    $region14: #{tpu_custom_call.1} parent=1 // pred_check
      _
    $region15: #{tpu_custom_call.1} parent=1 // pred_check_branch
      %52 = sbr.rel (0) target = $region17
    $region16: #{tpu_custom_call.1} parent=1 // pred_region
      %54 = vsyncadd [#allocation9], 0
      %s55 = sshll.u32 %s3, 4
      %s56 = int_to_ptr.hbm [resolvable:$true] %s55
      %s57 = sshll.u32 [#allocation8], 4
      %s58 = int_to_ptr.vmem [resolvable:$true] %s57
      %63 = dma.hbm_to_vmem [thread:$0]  %s56, 8192, %s58, [#allocation9], 256, 256, 16
    $region17: #{tpu_custom_call.1} parent=1 // pred_fallthru
      _
    // Predicated region
    $region18: #{tpu_custom_call.1} parent=1 // pred_check
      _
    $region19: #{tpu_custom_call.1} parent=1 // pred_check_branch
      %65 = sbr.rel (0) target = $region21
    $region20: #{tpu_custom_call.1} parent=1 // pred_region
      _
    $region21: #{tpu_custom_call.1} parent=1 // pred_fallthru
      _
    // Predicated region
    $region22: #{tpu_custom_call.1} parent=1 // pred_check
      _
    $region23: #{tpu_custom_call.1} parent=1 // pred_check_branch
      %67 = sbr.rel (0) target = $region25
    $region24: #{tpu_custom_call.1} parent=1 // pred_region
      %69 = dma.done [#allocation3], 256
    $region25: #{tpu_custom_call.1} parent=1 // pred_fallthru
      _
    // Predicated region
    $region26: #{tpu_custom_call.1} parent=1 // pred_check
      _
    $region27: #{tpu_custom_call.1} parent=1 // pred_check_branch
      %71 = sbr.rel (0) target = $region29
    $region28: #{tpu_custom_call.1} parent=1 // pred_region
      %73 = dma.done [#allocation6], 4096
    $region29: #{tpu_custom_call.1} parent=1 // pred_fallthru
      _
    // Predicated region
    $region30: #{tpu_custom_call.1} parent=1 // pred_check
      _
    $region31: #{tpu_custom_call.1} parent=1 // pred_check_branch
      %75 = sbr.rel (0) target = $region33
    $region32: #{tpu_custom_call.1} parent=1 // pred_region
      %77 = dma.done [#allocation6], 32
    $region33: #{tpu_custom_call.1} parent=1 // pred_fallthru
      _
    // Predicated region
    $region34: #{tpu_custom_call.1} parent=1 // pred_check
      _
    $region35: #{tpu_custom_call.1} parent=1 // pred_check_branch
      %79 = sbr.rel (0) target = $region37
    $region36: #{tpu_custom_call.1} parent=1 // pred_region
      %81 = dma.done [#allocation9], 8192
    $region37: #{tpu_custom_call.1} parent=1 // pred_fallthru
      _
    %v82 = vld [vmem:[#allocation2] sm:$0xff]
    %v83 = vld [vmem:[#allocation2 + $0x8] sm:$0xff]
    %v84 = vld [vmem:[#allocation5] sm:$0xff]
    %v85 = vld [vmem:[#allocation5 + $0x8] sm:$0xff]
    %v86 = vld [vmem:[#allocation5 + $0x10] sm:$0xff]
    %v87 = vld [vmem:[#allocation5 + $0x18] sm:$0xff]
    %v88 = vld [vmem:[#allocation5 + $0x20] sm:$0xff]
    %v89 = vld [vmem:[#allocation5 + $0x28] sm:$0xff]
    %v90 = vld [vmem:[#allocation5 + $0x30] sm:$0xff]
    %v91 = vld [vmem:[#allocation5 + $0x38] sm:$0xff]
    %v92 = vld [vmem:[#allocation5 + $0x40] sm:$0xff]
    %v93 = vld [vmem:[#allocation5 + $0x48] sm:$0xff]
    %v94 = vld [vmem:[#allocation5 + $0x50] sm:$0xff]
    %v95 = vld [vmem:[#allocation5 + $0x58] sm:$0xff]
    %v96 = vld [vmem:[#allocation5 + $0x60] sm:$0xff]
    %v97 = vld [vmem:[#allocation5 + $0x68] sm:$0xff]
    %v98 = vld [vmem:[#allocation5 + $0x70] sm:$0xff]
    %v99 = vld [vmem:[#allocation5 + $0x78] sm:$0xff]
    %v100 = vld [vmem:[#allocation5 + $0x80] sm:$0xff]
    %v101 = vld [vmem:[#allocation5 + $0x88] sm:$0xff]
    %v102 = vld [vmem:[#allocation5 + $0x90] sm:$0xff]
    %v103 = vld [vmem:[#allocation5 + $0x98] sm:$0xff]
    %v104 = vld [vmem:[#allocation5 + $0xa0] sm:$0xff]
    %v105 = vld [vmem:[#allocation5 + $0xa8] sm:$0xff]
    %v106 = vld [vmem:[#allocation5 + $0xb0] sm:$0xff]
    %v107 = vld [vmem:[#allocation5 + $0xb8] sm:$0xff]
    %v108 = vld [vmem:[#allocation5 + $0xc0] sm:$0xff]
    %v109 = vld [vmem:[#allocation5 + $0xc8] sm:$0xff]
    %v110 = vld [vmem:[#allocation5 + $0xd0] sm:$0xff]
    %v111 = vld [vmem:[#allocation5 + $0xd8] sm:$0xff]
    %v112 = vld [vmem:[#allocation5 + $0xe0] sm:$0xff]
    %v113 = vld [vmem:[#allocation5 + $0xe8] sm:$0xff]
    %v114 = vld [vmem:[#allocation5 + $0xf0] sm:$0xff]
    %v115 = vld [vmem:[#allocation5 + $0xf8] sm:$0xff]
    %v116 = vld [vmem:[#allocation7] sm:$0x3]
    %v118 = vperm.slane %v116, 0
    %v119 = vperm.slane %v116, 1
    %122 = vmatpush.msra.mxu0 %v114
    %123 = vmatpush.msra.mxu0 %v112
    %124 = vmatpush.msra.mxu0 %v110
    %125 = vmatpush.msra.mxu0 %v108
    %126 = vmatpush.msra.mxu0 %v106
    %127 = vmatpush.msra.mxu0 %v104
    %128 = vmatpush.msra.mxu0 %v102
    %129 = vmatpush.msra.mxu0 %v100
    %130 = vmatpush.msra.mxu0 %v98
    %131 = vmatpush.msra.mxu0 %v96
    %132 = vmatpush.msra.mxu0 %v94
    %133 = vmatpush.msra.mxu0 %v92
    %134 = vmatpush.msra.mxu0 %v90
    %135 = vmatpush.msra.mxu0 %v88
    %136 = vmatpush.msra.mxu0 %v86
    %137 = vmatpush.msra.mxu0 %v84
    %138 = vmatmul.f32.gmra.mxu0 %v82
    %v139 = vpop.f32.mrf.mxu0
    %v140 = vadd.f32 %v118, %v139
    %141 = vmatmul.f32.gmra.mxu0 %v83
    %v142 = vpop.f32.mrf.mxu0
    %v143 = vadd.f32 %v118, %v142
    %144 = vdwg.mxu0
    %145 = vmatpush.msra.mxu0 %v115
    %146 = vmatpush.msra.mxu0 %v113
    %147 = vmatpush.msra.mxu0 %v111
    %148 = vmatpush.msra.mxu0 %v109
    %149 = vmatpush.msra.mxu0 %v107
    %150 = vmatpush.msra.mxu0 %v105
    %151 = vmatpush.msra.mxu0 %v103
    %152 = vmatpush.msra.mxu0 %v101
    %153 = vmatpush.msra.mxu0 %v99
    %154 = vmatpush.msra.mxu0 %v97
    %155 = vmatpush.msra.mxu0 %v95
    %156 = vmatpush.msra.mxu0 %v93
    %157 = vmatpush.msra.mxu0 %v91
    %158 = vmatpush.msra.mxu0 %v89
    %159 = vmatpush.msra.mxu0 %v87
    %160 = vmatpush.msra.mxu0 %v85
    %161 = vmatmul.f32.gmra.mxu0 %v82
    %v162 = vpop.f32.mrf.mxu0
    %v163 = vadd.f32 %v119, %v162
    %164 = vmatmul.f32.gmra.mxu0 %v83
    %v165 = vpop.f32.mrf.mxu0
    %v166 = vadd.f32 %v119, %v165
    %167 = vdwg.mxu0
    %v168 = vxor.u32 %v140, 2147483648
    %v169 = vxor.u32 %v163, 2147483648
    %v170 = vxor.u32 %v143, 2147483648
    %v171 = vxor.u32 %v166, 2147483648
    %v172 = vmul.f32 %v168, 1.442695
    %v173 = vpow.pop %v172
    %v174 = vmul.f32 %v169, 1.442695
    %v175 = vpow.pop %v174
    %v176 = vmul.f32 %v170, 1.442695
    %v177 = vpow.pop %v176
    %v178 = vmul.f32 %v171, 1.442695
    %v179 = vpow.pop %v178
    %v180 = vadd.f32 %v173, 1.0
    %v181 = vadd.f32 %v175, 1.0
    %v182 = vadd.f32 %v177, 1.0
    %v183 = vadd.f32 %v179, 1.0
    %v184 = vrcp.pop %v180
    %v185 = vmul.f32 %v180, %v184
    %v186 = vsub.f32 1.0, %v185
    %v187 = vmul.f32 %v184, %v186
    %v188 = vadd.f32 %v184, %v187
    %vm189 = vweird.f32 %v180
    %vm190 = vweird.f32 %v184
    %vm191 = vmor %vm189, %vm190
    %v192 = vsel %vm191, %v184, %v188
    %v193 = vand.u32 2147483647, %v180
    %vm194 = vcmp.eq.f32.partialorder %v193, 8.507059e+37
    %v195 = vand.u32 %v180, 2147483648
    %v196 = vor.u32 1.1754944e-38, %v195
    %v197 = vsel %vm194, %v196, %v192
    %v198 = vmul.f32 1.0, %v197
    %v199 = vrcp.pop %v181
    %v200 = vmul.f32 %v181, %v199
    %v201 = vsub.f32 1.0, %v200
    %v202 = vmul.f32 %v199, %v201
    %v203 = vadd.f32 %v199, %v202
    %vm204 = vweird.f32 %v181
    %vm205 = vweird.f32 %v199
    %vm206 = vmor %vm204, %vm205
    %v207 = vsel %vm206, %v199, %v203
    %v208 = vand.u32 2147483647, %v181
    %vm209 = vcmp.eq.f32.partialorder %v208, 8.507059e+37
    %v210 = vand.u32 %v181, 2147483648
    %v211 = vor.u32 1.1754944e-38, %v210
    %v212 = vsel %vm209, %v211, %v207
    %v213 = vmul.f32 1.0, %v212
    %v214 = vrcp.pop %v182
    %v215 = vmul.f32 %v182, %v214
    %v216 = vsub.f32 1.0, %v215
    %v217 = vmul.f32 %v214, %v216
    %v218 = vadd.f32 %v214, %v217
    %vm219 = vweird.f32 %v182
    %vm220 = vweird.f32 %v214
    %vm221 = vmor %vm219, %vm220
    %v222 = vsel %vm221, %v214, %v218
    %v223 = vand.u32 2147483647, %v182
    %vm224 = vcmp.eq.f32.partialorder %v223, 8.507059e+37
    %v225 = vand.u32 %v182, 2147483648
    %v226 = vor.u32 1.1754944e-38, %v225
    %v227 = vsel %vm224, %v226, %v222
    %v228 = vmul.f32 1.0, %v227
    %v229 = vrcp.pop %v183
    %v230 = vmul.f32 %v183, %v229
    %v231 = vsub.f32 1.0, %v230
    %v232 = vmul.f32 %v229, %v231
    %v233 = vadd.f32 %v229, %v232
    %vm234 = vweird.f32 %v183
    %vm235 = vweird.f32 %v229
    %vm236 = vmor %vm234, %vm235
    %v237 = vsel %vm236, %v229, %v233
    %v238 = vand.u32 2147483647, %v183
    %vm239 = vcmp.eq.f32.partialorder %v238, 8.507059e+37
    %v240 = vand.u32 %v183, 2147483648
    %v241 = vor.u32 1.1754944e-38, %v240
    %v242 = vsel %vm239, %v241, %v237
    %v243 = vmul.f32 1.0, %v242
    %v244 = vmul.f32 %v140, %v198
    %v245 = vmul.f32 %v163, %v213
    %v246 = vmul.f32 %v143, %v228
    %v247 = vmul.f32 %v166, %v243
    %v248 = vld [vmem:[#allocation8] sm:$0xff]
    %v249 = vld [vmem:[#allocation8 + $0x8] sm:$0xff]
    %v250 = vld [vmem:[#allocation8 + $0x10] sm:$0xff]
    %v251 = vld [vmem:[#allocation8 + $0x18] sm:$0xff]
    %v252 = vld [vmem:[#allocation8 + $0x20] sm:$0xff]
    %v253 = vld [vmem:[#allocation8 + $0x28] sm:$0xff]
    %v254 = vld [vmem:[#allocation8 + $0x30] sm:$0xff]
    %v255 = vld [vmem:[#allocation8 + $0x38] sm:$0xff]
    %v256 = vld [vmem:[#allocation8 + $0x40] sm:$0xff]
    %v257 = vld [vmem:[#allocation8 + $0x48] sm:$0xff]
    %v258 = vld [vmem:[#allocation8 + $0x50] sm:$0xff]
    %v259 = vld [vmem:[#allocation8 + $0x58] sm:$0xff]
    %v260 = vld [vmem:[#allocation8 + $0x60] sm:$0xff]
    %v261 = vld [vmem:[#allocation8 + $0x68] sm:$0xff]
    %v262 = vld [vmem:[#allocation8 + $0x70] sm:$0xff]
    %v263 = vld [vmem:[#allocation8 + $0x78] sm:$0xff]
    %v264 = vld [vmem:[#allocation8 + $0x80] sm:$0xff]
    %v265 = vld [vmem:[#allocation8 + $0x88] sm:$0xff]
    %v266 = vld [vmem:[#allocation8 + $0x90] sm:$0xff]
    %v267 = vld [vmem:[#allocation8 + $0x98] sm:$0xff]
    %v268 = vld [vmem:[#allocation8 + $0xa0] sm:$0xff]
    %v269 = vld [vmem:[#allocation8 + $0xa8] sm:$0xff]
    %v270 = vld [vmem:[#allocation8 + $0xb0] sm:$0xff]
    %v271 = vld [vmem:[#allocation8 + $0xb8] sm:$0xff]
    %v272 = vld [vmem:[#allocation8 + $0xc0] sm:$0xff]
    %v273 = vld [vmem:[#allocation8 + $0xc8] sm:$0xff]
    %v274 = vld [vmem:[#allocation8 + $0xd0] sm:$0xff]
    %v275 = vld [vmem:[#allocation8 + $0xd8] sm:$0xff]
    %v276 = vld [vmem:[#allocation8 + $0xe0] sm:$0xff]
    %v277 = vld [vmem:[#allocation8 + $0xe8] sm:$0xff]
    %v278 = vld [vmem:[#allocation8 + $0xf0] sm:$0xff]
    %v279 = vld [vmem:[#allocation8 + $0xf8] sm:$0xff]
    %v280 = vld [vmem:[#allocation8 + $0x100] sm:$0xff]
    %v281 = vld [vmem:[#allocation8 + $0x108] sm:$0xff]
    %v282 = vld [vmem:[#allocation8 + $0x110] sm:$0xff]
    %v283 = vld [vmem:[#allocation8 + $0x118] sm:$0xff]
    %v284 = vld [vmem:[#allocation8 + $0x120] sm:$0xff]
    %v285 = vld [vmem:[#allocation8 + $0x128] sm:$0xff]
    %v286 = vld [vmem:[#allocation8 + $0x130] sm:$0xff]
    %v287 = vld [vmem:[#allocation8 + $0x138] sm:$0xff]
    %v288 = vld [vmem:[#allocation8 + $0x140] sm:$0xff]
    %v289 = vld [vmem:[#allocation8 + $0x148] sm:$0xff]
    %v290 = vld [vmem:[#allocation8 + $0x150] sm:$0xff]
    %v291 = vld [vmem:[#allocation8 + $0x158] sm:$0xff]
    %v292 = vld [vmem:[#allocation8 + $0x160] sm:$0xff]
    %v293 = vld [vmem:[#allocation8 + $0x168] sm:$0xff]
    %v294 = vld [vmem:[#allocation8 + $0x170] sm:$0xff]
    %v295 = vld [vmem:[#allocation8 + $0x178] sm:$0xff]
    %v296 = vld [vmem:[#allocation8 + $0x180] sm:$0xff]
    %v297 = vld [vmem:[#allocation8 + $0x188] sm:$0xff]
    %v298 = vld [vmem:[#allocation8 + $0x190] sm:$0xff]
    %v299 = vld [vmem:[#allocation8 + $0x198] sm:$0xff]
    %v300 = vld [vmem:[#allocation8 + $0x1a0] sm:$0xff]
    %v301 = vld [vmem:[#allocation8 + $0x1a8] sm:$0xff]
    %v302 = vld [vmem:[#allocation8 + $0x1b0] sm:$0xff]
    %v303 = vld [vmem:[#allocation8 + $0x1b8] sm:$0xff]
    %v304 = vld [vmem:[#allocation8 + $0x1c0] sm:$0xff]
    %v305 = vld [vmem:[#allocation8 + $0x1c8] sm:$0xff]
    %v306 = vld [vmem:[#allocation8 + $0x1d0] sm:$0xff]
    %v307 = vld [vmem:[#allocation8 + $0x1d8] sm:$0xff]
    %v308 = vld [vmem:[#allocation8 + $0x1e0] sm:$0xff]
    %v309 = vld [vmem:[#allocation8 + $0x1e8] sm:$0xff]
    %v310 = vld [vmem:[#allocation8 + $0x1f0] sm:$0xff]
    %v311 = vld [vmem:[#allocation8 + $0x1f8] sm:$0xff]
    %v312 = vld [vmem:[%s4] sm:$0x3]
    %v314 = vperm.slane %v312, 0
    %v315 = vperm.slane %v312, 1
    %318 = vmatpush.msra.mxu0 %v278
    %319 = vmatpush.msra.mxu0 %v276
    %320 = vmatpush.msra.mxu0 %v274
    %321 = vmatpush.msra.mxu0 %v272
    %322 = vmatpush.msra.mxu0 %v270
    %323 = vmatpush.msra.mxu0 %v268
    %324 = vmatpush.msra.mxu0 %v266
    %325 = vmatpush.msra.mxu0 %v264
    %326 = vmatpush.msra.mxu0 %v262
    %327 = vmatpush.msra.mxu0 %v260
    %328 = vmatpush.msra.mxu0 %v258
    %329 = vmatpush.msra.mxu0 %v256
    %330 = vmatpush.msra.mxu0 %v254
    %331 = vmatpush.msra.mxu0 %v252
    %332 = vmatpush.msra.mxu0 %v250
    %333 = vmatpush.msra.mxu0 %v248
    %334 = vmatmul.f32.gmra.mxu0 %v244
    %v335 = vpop.f32.mrf.mxu0
    %v336 = vadd.f32 %v314, %v335
    %337 = vmatmul.f32.gmra.mxu0 %v246
    %v338 = vpop.f32.mrf.mxu0
    %v339 = vadd.f32 %v314, %v338
    %340 = vdwg.mxu0
    %341 = vmatpush.msra.mxu0 %v310
    %342 = vmatpush.msra.mxu0 %v308
    %343 = vmatpush.msra.mxu0 %v306
    %344 = vmatpush.msra.mxu0 %v304
    %345 = vmatpush.msra.mxu0 %v302
    %346 = vmatpush.msra.mxu0 %v300
    %347 = vmatpush.msra.mxu0 %v298
    %348 = vmatpush.msra.mxu0 %v296
    %349 = vmatpush.msra.mxu0 %v294
    %350 = vmatpush.msra.mxu0 %v292
    %351 = vmatpush.msra.mxu0 %v290
    %352 = vmatpush.msra.mxu0 %v288
    %353 = vmatpush.msra.mxu0 %v286
    %354 = vmatpush.msra.mxu0 %v284
    %355 = vmatpush.msra.mxu0 %v282
    %356 = vmatpush.msra.mxu0 %v280
    %357 = vmatmul.f32.gmra.mxu0 %v245
    %v358 = vpop.f32.mrf.mxu0
    %v359 = vadd.f32 %v336, %v358
    %360 = vmatmul.f32.gmra.mxu0 %v247
    %v361 = vpop.f32.mrf.mxu0
    %v362 = vadd.f32 %v339, %v361
    %363 = vdwg.mxu0
    %364 = vmatpush.msra.mxu0 %v279
    %365 = vmatpush.msra.mxu0 %v277
    %366 = vmatpush.msra.mxu0 %v275
    %367 = vmatpush.msra.mxu0 %v273
    %368 = vmatpush.msra.mxu0 %v271
    %369 = vmatpush.msra.mxu0 %v269
    %370 = vmatpush.msra.mxu0 %v267
    %371 = vmatpush.msra.mxu0 %v265
    %372 = vmatpush.msra.mxu0 %v263
    %373 = vmatpush.msra.mxu0 %v261
    %374 = vmatpush.msra.mxu0 %v259
    %375 = vmatpush.msra.mxu0 %v257
    %376 = vmatpush.msra.mxu0 %v255
    %377 = vmatpush.msra.mxu0 %v253
    %378 = vmatpush.msra.mxu0 %v251
    %379 = vmatpush.msra.mxu0 %v249
    %380 = vmatmul.f32.gmra.mxu0 %v244
    %v381 = vpop.f32.mrf.mxu0
    %v382 = vadd.f32 %v315, %v381
    %383 = vmatmul.f32.gmra.mxu0 %v246
    %v384 = vpop.f32.mrf.mxu0
    %v385 = vadd.f32 %v315, %v384
    %386 = vdwg.mxu0
    %387 = vmatpush.msra.mxu0 %v311
    %388 = vmatpush.msra.mxu0 %v309
    %389 = vmatpush.msra.mxu0 %v307
    %390 = vmatpush.msra.mxu0 %v305
    %391 = vmatpush.msra.mxu0 %v303
    %392 = vmatpush.msra.mxu0 %v301
    %393 = vmatpush.msra.mxu0 %v299
    %394 = vmatpush.msra.mxu0 %v297
    %395 = vmatpush.msra.mxu0 %v295
    %396 = vmatpush.msra.mxu0 %v293
    %397 = vmatpush.msra.mxu0 %v291
    %398 = vmatpush.msra.mxu0 %v289
    %399 = vmatpush.msra.mxu0 %v287
    %400 = vmatpush.msra.mxu0 %v285
    %401 = vmatpush.msra.mxu0 %v283
    %402 = vmatpush.msra.mxu0 %v281
    %403 = vmatmul.f32.gmra.mxu0 %v245
    %v404 = vpop.f32.mrf.mxu0
    %v405 = vadd.f32 %v382, %v404
    %406 = vmatmul.f32.gmra.mxu0 %v247
    %v407 = vpop.f32.mrf.mxu0
    %v408 = vadd.f32 %v385, %v407
    %409 = vdwg.mxu0
    %410 = vst [vmem:[#allocation10] sm:$0xff] %v359
    %411 = vst [vmem:[#allocation10 + $0x8] sm:$0xff] %v405
    %412 = vst [vmem:[#allocation10 + $0x10] sm:$0xff] %v362
    %413 = vst [vmem:[#allocation10 + $0x18] sm:$0xff] %v408
    // Predicated region
    $region38: #{tpu_custom_call.1} parent=1 // pred_check
      _
    $region39: #{tpu_custom_call.1} parent=1 // pred_check_branch
      %415 = sbr.rel (0) target = $region41
    $region40: #{tpu_custom_call.1} parent=1 // pred_region
      %417 = vsyncadd [#allocation4], 0
      %s418 = sshll.u32 [#allocation10], 4
      %s419 = int_to_ptr.vmem [resolvable:$true] %s418
      %s420 = sshll.u32 %s5, 4
      %s421 = int_to_ptr.hbm [resolvable:$true] %s420
      %426 = dma.vmem_to_hbm [thread:$0]  %s419, 512, %s421, [#allocation4], 256, 256, 16
    $region41: #{tpu_custom_call.1} parent=1 // pred_fallthru
      _
    // Predicated region
    $region42: #{tpu_custom_call.1} parent=1 // pred_check
      _
    $region43: #{tpu_custom_call.1} parent=1 // pred_check_branch
      %428 = sbr.rel (0) target = $region45
    $region44: #{tpu_custom_call.1} parent=1 // pred_region
      %430 = dma.done [#allocation4], 512
    $region45: #{tpu_custom_call.1} parent=1 // pred_fallthru
      _
    %431 = vsyncpa [#allocation3], 1
    %432 = vsyncpa [#allocation6], 1
    %433 = vsyncpa [#allocation9], 1
    %434 = vsyncpa [#allocation4], 1

// kernel: tpu_custom_call.1
$region0: #{tpu_custom_call.1}
  #allocation0 [shape = 'u32[]', space=smem, size = 0x4, offset = 0x4, fixed_abs, tag = 'smem constant byte address 0x4 - core index']
  #allocation1 [shape = 'u32[72,128]{1,0:T(1,128)}', space=vmem, size = 0x9000, scoped, tag = 'internal scratch']
  %s0 = inlined_call_operand.hbm [shape: f32[16,128], index: 0, kind: input, shape index: {}]
  %s1 = inlined_call_operand.hbm [shape: f32[128,256], index: 1, kind: input, shape index: {}]
  %s2 = inlined_call_operand.hbm [shape: f32[1,256], index: 2, kind: input, shape index: {}]
  %s3 = inlined_call_operand.hbm [shape: f32[256,256], index: 3, kind: input, shape index: {}]
  %s4 = inlined_call_operand.vmem [shape: f32[1,256], index: 4, kind: input, shape index: {}]
  %s5 = inlined_call_operand.hbm [shape: f32[16,256], index: 5, kind: output, shape index: {}]
  %s6 = sld [smem:[#allocation0]]
  $region46: #{tpu_custom_call.1} parent=0
    _
  %s8 = ssub.s32 1, %s6
  %s9 = scalar_select 0, %s8, %s6
  $region1: #{tpu_custom_call.1} parent=0
    #allocation2 [shape = 'u8[8192]{0}', space=vmem, size = 0x2000, scoped, tag = 'input window, operand 0, single buffered']
    #allocation3 [shape = 's32[1]{0}', space=sflag, size = 0x4, scoped, tag = 'scoped memory for tpu_custom_call.1']
    #allocation4 [shape = 's32[1]{0}', space=sflag, size = 0x4, scoped, tag = 'scoped memory for tpu_custom_call.1']
    #allocation5 [shape = 'u8[131072]{0}', space=vmem, size = 0x20000, scoped, tag = 'input window, operand 1, single buffered']
    #allocation6 [shape = 's32[1]{0}', space=sflag, size = 0x4, scoped, tag = 'scoped memory for tpu_custom_call.1']
    #allocation7 [shape = 'u8[1024]{0}', space=vmem, size = 0x400, scoped, tag = 'input window, operand 2, single buffered']
    #allocation8 [shape = 'u8[262144]{0}', space=vmem, size = 0x40000, scoped, tag = 'input window, operand 3, single buffered']
    #allocation9 [shape = 's32[1]{0}', space=sflag, size = 0x4, scoped, tag = 'scoped memory for tpu_custom_call.1']
    #allocation10 [shape = 'u8[16384]{0}', space=vmem, size = 0x4000, scoped, tag = 'output window, operand 0, single buffered']
    %10 = vsyncpa [#allocation3], 0
    %11 = vsyncpa [#allocation6], 0
    %12 = vsyncpa [#allocation9], 0
    %13 = vsyncpa [#allocation4], 0
    // Predicated region
    $region2: #{tpu_custom_call.1} parent=1 // pred_check
      _
    $region3: #{tpu_custom_call.1} parent=1 // pred_check_branch
      %15 = sbr.rel (0) target = $region5
    $region4: #{tpu_custom_call.1} parent=1 // pred_region
      %17 = vsyncadd [#allocation3], 0
      %s18 = sshll.u32 %s0, 4
      %s19 = int_to_ptr.hbm [resolvable:$true] %s18
      %s20 = sshll.u32 [#allocation2], 4
      %s21 = int_to_ptr.vmem [resolvable:$true] %s20
      %26 = dma.hbm_to_vmem [thread:$0]  %s19, 256, %s21, [#allocation3], 128, 128, 8
    $region5: #{tpu_custom_call.1} parent=1 // pred_fallthru
      _
    // Predicated region
    $region6: #{tpu_custom_call.1} parent=1 // pred_check
      _
    $region7: #{tpu_custom_call.1} parent=1 // pred_check_branch
      %28 = sbr.rel (0) target = $region9
    $region8: #{tpu_custom_call.1} parent=1 // pred_region
      %30 = vsyncadd [#allocation6], 0
      %s31 = sshll.u32 %s1, 4
      %s32 = int_to_ptr.hbm [resolvable:$true] %s31
      %s33 = sshll.u32 [#allocation5], 4
      %s34 = int_to_ptr.vmem [resolvable:$true] %s33
      %39 = dma.hbm_to_vmem [thread:$0]  %s32, 4096, %s34, [#allocation6], 256, 256, 16
    $region9: #{tpu_custom_call.1} parent=1 // pred_fallthru
      _
    // Predicated region
    $region10: #{tpu_custom_call.1} parent=1 // pred_check
      _
    $region11: #{tpu_custom_call.1} parent=1 // pred_check_branch
      %41 = sbr.rel (0) target = $region13
    $region12: #{tpu_custom_call.1} parent=1 // pred_region
      %43 = vsyncadd [#allocation6], 0
      %s45 = sshll.u32 %s2, 4
      %s46 = int_to_ptr.hbm [resolvable:$true] %s45
      %s47 = sshll.u32 [#allocation7], 4
      %s48 = int_to_ptr.vmem [resolvable:$true] %s47
      %50 = dma.hbm_to_vmem [thread:$0]  %s46, 32, %s48, [#allocation6]
    $region13: #{tpu_custom_call.1} parent=1 // pred_fallthru
      _
    // Predicated region
    $region14: #{tpu_custom_call.1} parent=1 // pred_check
      _
    $region15: #{tpu_custom_call.1} parent=1 // pred_check_branch
      %52 = sbr.rel (0) target = $region17
    $region16: #{tpu_custom_call.1} parent=1 // pred_region
      %54 = vsyncadd [#allocation9], 0
      %s55 = sshll.u32 %s3, 4
      %s56 = int_to_ptr.hbm [resolvable:$true] %s55
      %s57 = sshll.u32 [#allocation8], 4
      %s58 = int_to_ptr.vmem [resolvable:$true] %s57
      %63 = dma.hbm_to_vmem [thread:$0]  %s56, 8192, %s58, [#allocation9], 256, 256, 16
    $region17: #{tpu_custom_call.1} parent=1 // pred_fallthru
      _
    // Predicated region
    $region18: #{tpu_custom_call.1} parent=1 // pred_check
      _
    $region19: #{tpu_custom_call.1} parent=1 // pred_check_branch
      %65 = sbr.rel (0) target = $region21
    $region20: #{tpu_custom_call.1} parent=1 // pred_region
      _
    $region21: #{tpu_custom_call.1} parent=1 // pred_fallthru
      _
    // Predicated region
    $region22: #{tpu_custom_call.1} parent=1 // pred_check
      _
    $region23: #{tpu_custom_call.1} parent=1 // pred_check_branch
      %67 = sbr.rel (0) target = $region25
    $region24: #{tpu_custom_call.1} parent=1 // pred_region
      %69 = dma.done [#allocation3], 256
    $region25: #{tpu_custom_call.1} parent=1 // pred_fallthru
      _
    // Predicated region
    $region26: #{tpu_custom_call.1} parent=1 // pred_check
      _
    $region27: #{tpu_custom_call.1} parent=1 // pred_check_branch
      %71 = sbr.rel (0) target = $region29
    $region28: #{tpu_custom_call.1} parent=1 // pred_region
      %73 = dma.done [#allocation6], 4096
    $region29: #{tpu_custom_call.1} parent=1 // pred_fallthru
      _
    // Predicated region
    $region30: #{tpu_custom_call.1} parent=1 // pred_check
      _
    $region31: #{tpu_custom_call.1} parent=1 // pred_check_branch
      %75 = sbr.rel (0) target = $region33
    $region32: #{tpu_custom_call.1} parent=1 // pred_region
      %77 = dma.done [#allocation6], 32
    $region33: #{tpu_custom_call.1} parent=1 // pred_fallthru
      _
    // Predicated region
    $region34: #{tpu_custom_call.1} parent=1 // pred_check
      _
    $region35: #{tpu_custom_call.1} parent=1 // pred_check_branch
      %79 = sbr.rel (0) target = $region37
    $region36: #{tpu_custom_call.1} parent=1 // pred_region
      %81 = dma.done [#allocation9], 8192
    $region37: #{tpu_custom_call.1} parent=1 // pred_fallthru
      _
    %v82 = vld [vmem:[#allocation2] sm:$0xff]
    %v83 = vld [vmem:[#allocation2 + $0x8] sm:$0xff]
    %v84 = vld [vmem:[#allocation5] sm:$0xff]
    %v85 = vld [vmem:[#allocation5 + $0x8] sm:$0xff]
    %v86 = vld [vmem:[#allocation5 + $0x10] sm:$0xff]
    %v87 = vld [vmem:[#allocation5 + $0x18] sm:$0xff]
    %v88 = vld [vmem:[#allocation5 + $0x20] sm:$0xff]
    %v89 = vld [vmem:[#allocation5 + $0x28] sm:$0xff]
    %v90 = vld [vmem:[#allocation5 + $0x30] sm:$0xff]
    %v91 = vld [vmem:[#allocation5 + $0x38] sm:$0xff]
    %v92 = vld [vmem:[#allocation5 + $0x40] sm:$0xff]
    %v93 = vld [vmem:[#allocation5 + $0x48] sm:$0xff]
    %v94 = vld [vmem:[#allocation5 + $0x50] sm:$0xff]
    %v95 = vld [vmem:[#allocation5 + $0x58] sm:$0xff]
    %v96 = vld [vmem:[#allocation5 + $0x60] sm:$0xff]
    %v97 = vld [vmem:[#allocation5 + $0x68] sm:$0xff]
    %v98 = vld [vmem:[#allocation5 + $0x70] sm:$0xff]
    %v99 = vld [vmem:[#allocation5 + $0x78] sm:$0xff]
    %v100 = vld [vmem:[#allocation5 + $0x80] sm:$0xff]
    %v101 = vld [vmem:[#allocation5 + $0x88] sm:$0xff]
    %v102 = vld [vmem:[#allocation5 + $0x90] sm:$0xff]
    %v103 = vld [vmem:[#allocation5 + $0x98] sm:$0xff]
    %v104 = vld [vmem:[#allocation5 + $0xa0] sm:$0xff]
    %v105 = vld [vmem:[#allocation5 + $0xa8] sm:$0xff]
    %v106 = vld [vmem:[#allocation5 + $0xb0] sm:$0xff]
    %v107 = vld [vmem:[#allocation5 + $0xb8] sm:$0xff]
    %v108 = vld [vmem:[#allocation5 + $0xc0] sm:$0xff]
    %v109 = vld [vmem:[#allocation5 + $0xc8] sm:$0xff]
    %v110 = vld [vmem:[#allocation5 + $0xd0] sm:$0xff]
    %v111 = vld [vmem:[#allocation5 + $0xd8] sm:$0xff]
    %v112 = vld [vmem:[#allocation5 + $0xe0] sm:$0xff]
    %v113 = vld [vmem:[#allocation5 + $0xe8] sm:$0xff]
    %v114 = vld [vmem:[#allocation5 + $0xf0] sm:$0xff]
    %v115 = vld [vmem:[#allocation5 + $0xf8] sm:$0xff]
    %v116 = vld [vmem:[#allocation7] sm:$0x3]
    %v118 = vperm.slane %v116, 0
    %v119 = vperm.slane %v116, 1
    %122 = vmatpush.msra.mxu0 %v114
    %123 = vmatpush.msra.mxu0 %v112
    %124 = vmatpush.msra.mxu0 %v110
    %125 = vmatpush.msra.mxu0 %v108
    %126 = vmatpush.msra.mxu0 %v106
    %127 = vmatpush.msra.mxu0 %v104
    %128 = vmatpush.msra.mxu0 %v102
    %129 = vmatpush.msra.mxu0 %v100
    %130 = vmatpush.msra.mxu0 %v98
    %131 = vmatpush.msra.mxu0 %v96
    %132 = vmatpush.msra.mxu0 %v94
    %133 = vmatpush.msra.mxu0 %v92
    %134 = vmatpush.msra.mxu0 %v90
    %135 = vmatpush.msra.mxu0 %v88
    %136 = vmatpush.msra.mxu0 %v86
    %137 = vmatpush.msra.mxu0 %v84
    %138 = vmatmul.f32.gmra.mxu0 %v82
    %v139 = vpop.f32.mrf.mxu0
    %v140 = vadd.f32 %v118, %v139
    %141 = vmatmul.f32.gmra.mxu0 %v83
    %v142 = vpop.f32.mrf.mxu0
    %v143 = vadd.f32 %v118, %v142
    %144 = vdwg.mxu0
    %145 = vmatpush.msra.mxu0 %v115
    %146 = vmatpush.msra.mxu0 %v113
    %147 = vmatpush.msra.mxu0 %v111
    %148 = vmatpush.msra.mxu0 %v109
    %149 = vmatpush.msra.mxu0 %v107
    %150 = vmatpush.msra.mxu0 %v105
    %151 = vmatpush.msra.mxu0 %v103
    %152 = vmatpush.msra.mxu0 %v101
    %153 = vmatpush.msra.mxu0 %v99
    %154 = vmatpush.msra.mxu0 %v97
    %155 = vmatpush.msra.mxu0 %v95
    %156 = vmatpush.msra.mxu0 %v93
    %157 = vmatpush.msra.mxu0 %v91
    %158 = vmatpush.msra.mxu0 %v89
    %159 = vmatpush.msra.mxu0 %v87
    %160 = vmatpush.msra.mxu0 %v85
    %161 = vmatmul.f32.gmra.mxu0 %v82
    %v162 = vpop.f32.mrf.mxu0
    %v163 = vadd.f32 %v119, %v162
    %164 = vmatmul.f32.gmra.mxu0 %v83
    %v165 = vpop.f32.mrf.mxu0
    %v166 = vadd.f32 %v119, %v165
    %167 = vdwg.mxu0
    %v168 = vxor.u32 %v140, 2147483648
    %v169 = vxor.u32 %v163, 2147483648
    %v170 = vxor.u32 %v143, 2147483648
    %v171 = vxor.u32 %v166, 2147483648
    %v172 = vmul.f32 %v168, 1.442695
    %v173 = vpow.pop %v172
    %v174 = vmul.f32 %v169, 1.442695
    %v175 = vpow.pop %v174
    %v176 = vmul.f32 %v170, 1.442695
    %v177 = vpow.pop %v176
    %v178 = vmul.f32 %v171, 1.442695
    %v179 = vpow.pop %v178
    %v180 = vadd.f32 %v173, 1.0
    %v181 = vadd.f32 %v175, 1.0
    %v182 = vadd.f32 %v177, 1.0
    %v183 = vadd.f32 %v179, 1.0
    %v184 = vrcp.pop %v180
    %v185 = vmul.f32 %v180, %v184
    %v186 = vsub.f32 1.0, %v185
    %v187 = vmul.f32 %v184, %v186
    %v188 = vadd.f32 %v184, %v187
    %vm189 = vweird.f32 %v180
    %vm190 = vweird.f32 %v184
    %vm191 = vmor %vm189, %vm190
    %v192 = vsel %vm191, %v184, %v188
    %v193 = vand.u32 2147483647, %v180
    %vm194 = vcmp.eq.f32.partialorder %v193, 8.507059e+37
    %v195 = vand.u32 %v180, 2147483648
    %v196 = vor.u32 1.1754944e-38, %v195
    %v197 = vsel %vm194, %v196, %v192
    %v198 = vmul.f32 1.0, %v197
    %v199 = vrcp.pop %v181
    %v200 = vmul.f32 %v181, %v199
    %v201 = vsub.f32 1.0, %v200
    %v202 = vmul.f32 %v199, %v201
    %v203 = vadd.f32 %v199, %v202
    %vm204 = vweird.f32 %v181
    %vm205 = vweird.f32 %v199
    %vm206 = vmor %vm204, %vm205
    %v207 = vsel %vm206, %v199, %v203
    %v208 = vand.u32 2147483647, %v181
    %vm209 = vcmp.eq.f32.partialorder %v208, 8.507059e+37
    %v210 = vand.u32 %v181, 2147483648
    %v211 = vor.u32 1.1754944e-38, %v210
    %v212 = vsel %vm209, %v211, %v207
    %v213 = vmul.f32 1.0, %v212
    %v214 = vrcp.pop %v182
    %v215 = vmul.f32 %v182, %v214
    %v216 = vsub.f32 1.0, %v215
    %v217 = vmul.f32 %v214, %v216
    %v218 = vadd.f32 %v214, %v217
    %vm219 = vweird.f32 %v182
    %vm220 = vweird.f32 %v214
    %vm221 = vmor %vm219, %vm220
    %v222 = vsel %vm221, %v214, %v218
    %v223 = vand.u32 2147483647, %v182
    %vm224 = vcmp.eq.f32.partialorder %v223, 8.507059e+37
    %v225 = vand.u32 %v182, 2147483648
    %v226 = vor.u32 1.1754944e-38, %v225
    %v227 = vsel %vm224, %v226, %v222
    %v228 = vmul.f32 1.0, %v227
    %v229 = vrcp.pop %v183
    %v230 = vmul.f32 %v183, %v229
    %v231 = vsub.f32 1.0, %v230
    %v232 = vmul.f32 %v229, %v231
    %v233 = vadd.f32 %v229, %v232
    %vm234 = vweird.f32 %v183
    %vm235 = vweird.f32 %v229
    %vm236 = vmor %vm234, %vm235
    %v237 = vsel %vm236, %v229, %v233
    %v238 = vand.u32 2147483647, %v183
    %vm239 = vcmp.eq.f32.partialorder %v238, 8.507059e+37
    %v240 = vand.u32 %v183, 2147483648
    %v241 = vor.u32 1.1754944e-38, %v240
    %v242 = vsel %vm239, %v241, %v237
    %v243 = vmul.f32 1.0, %v242
    %v244 = vmul.f32 %v140, %v198
    %v245 = vmul.f32 %v163, %v213
    %v246 = vmul.f32 %v143, %v228
    %v247 = vmul.f32 %v166, %v243
    %v248 = vld [vmem:[#allocation8] sm:$0xff]
    %v249 = vld [vmem:[#allocation8 + $0x8] sm:$0xff]
    %v250 = vld [vmem:[#allocation8 + $0x10] sm:$0xff]
    %v251 = vld [vmem:[#allocation8 + $0x18] sm:$0xff]
    %v252 = vld [vmem:[#allocation8 + $0x20] sm:$0xff]
    %v253 = vld [vmem:[#allocation8 + $0x28] sm:$0xff]
    %v254 = vld [vmem:[#allocation8 + $0x30] sm:$0xff]
    %v255 = vld [vmem:[#allocation8 + $0x38] sm:$0xff]
    %v256 = vld [vmem:[#allocation8 + $0x40] sm:$0xff]
    %v257 = vld [vmem:[#allocation8 + $0x48] sm:$0xff]
    %v258 = vld [vmem:[#allocation8 + $0x50] sm:$0xff]
    %v259 = vld [vmem:[#allocation8 + $0x58] sm:$0xff]
    %v260 = vld [vmem:[#allocation8 + $0x60] sm:$0xff]
    %v261 = vld [vmem:[#allocation8 + $0x68] sm:$0xff]
    %v262 = vld [vmem:[#allocation8 + $0x70] sm:$0xff]
    %v263 = vld [vmem:[#allocation8 + $0x78] sm:$0xff]
    %v264 = vld [vmem:[#allocation8 + $0x80] sm:$0xff]
    %v265 = vld [vmem:[#allocation8 + $0x88] sm:$0xff]
    %v266 = vld [vmem:[#allocation8 + $0x90] sm:$0xff]
    %v267 = vld [vmem:[#allocation8 + $0x98] sm:$0xff]
    %v268 = vld [vmem:[#allocation8 + $0xa0] sm:$0xff]
    %v269 = vld [vmem:[#allocation8 + $0xa8] sm:$0xff]
    %v270 = vld [vmem:[#allocation8 + $0xb0] sm:$0xff]
    %v271 = vld [vmem:[#allocation8 + $0xb8] sm:$0xff]
    %v272 = vld [vmem:[#allocation8 + $0xc0] sm:$0xff]
    %v273 = vld [vmem:[#allocation8 + $0xc8] sm:$0xff]
    %v274 = vld [vmem:[#allocation8 + $0xd0] sm:$0xff]
    %v275 = vld [vmem:[#allocation8 + $0xd8] sm:$0xff]
    %v276 = vld [vmem:[#allocation8 + $0xe0] sm:$0xff]
    %v277 = vld [vmem:[#allocation8 + $0xe8] sm:$0xff]
    %v278 = vld [vmem:[#allocation8 + $0xf0] sm:$0xff]
    %v279 = vld [vmem:[#allocation8 + $0xf8] sm:$0xff]
    %v280 = vld [vmem:[#allocation8 + $0x100] sm:$0xff]
    %v281 = vld [vmem:[#allocation8 + $0x108] sm:$0xff]
    %v282 = vld [vmem:[#allocation8 + $0x110] sm:$0xff]
    %v283 = vld [vmem:[#allocation8 + $0x118] sm:$0xff]
    %v284 = vld [vmem:[#allocation8 + $0x120] sm:$0xff]
    %v285 = vld [vmem:[#allocation8 + $0x128] sm:$0xff]
    %v286 = vld [vmem:[#allocation8 + $0x130] sm:$0xff]
    %v287 = vld [vmem:[#allocation8 + $0x138] sm:$0xff]
    %v288 = vld [vmem:[#allocation8 + $0x140] sm:$0xff]
    %v289 = vld [vmem:[#allocation8 + $0x148] sm:$0xff]
    %v290 = vld [vmem:[#allocation8 + $0x150] sm:$0xff]
    %v291 = vld [vmem:[#allocation8 + $0x158] sm:$0xff]
    %v292 = vld [vmem:[#allocation8 + $0x160] sm:$0xff]
    %v293 = vld [vmem:[#allocation8 + $0x168] sm:$0xff]
    %v294 = vld [vmem:[#allocation8 + $0x170] sm:$0xff]
    %v295 = vld [vmem:[#allocation8 + $0x178] sm:$0xff]
    %v296 = vld [vmem:[#allocation8 + $0x180] sm:$0xff]
    %v297 = vld [vmem:[#allocation8 + $0x188] sm:$0xff]
    %v298 = vld [vmem:[#allocation8 + $0x190] sm:$0xff]
    %v299 = vld [vmem:[#allocation8 + $0x198] sm:$0xff]
    %v300 = vld [vmem:[#allocation8 + $0x1a0] sm:$0xff]
    %v301 = vld [vmem:[#allocation8 + $0x1a8] sm:$0xff]
    %v302 = vld [vmem:[#allocation8 + $0x1b0] sm:$0xff]
    %v303 = vld [vmem:[#allocation8 + $0x1b8] sm:$0xff]
    %v304 = vld [vmem:[#allocation8 + $0x1c0] sm:$0xff]
    %v305 = vld [vmem:[#allocation8 + $0x1c8] sm:$0xff]
    %v306 = vld [vmem:[#allocation8 + $0x1d0] sm:$0xff]
    %v307 = vld [vmem:[#allocation8 + $0x1d8] sm:$0xff]
    %v308 = vld [vmem:[#allocation8 + $0x1e0] sm:$0xff]
    %v309 = vld [vmem:[#allocation8 + $0x1e8] sm:$0xff]
    %v310 = vld [vmem:[#allocation8 + $0x1f0] sm:$0xff]
    %v311 = vld [vmem:[#allocation8 + $0x1f8] sm:$0xff]
    %v312 = vld [vmem:[%s4] sm:$0x3]
    %v314 = vperm.slane %v312, 0
    %v315 = vperm.slane %v312, 1
    %318 = vmatpush.msra.mxu0 %v278
    %319 = vmatpush.msra.mxu0 %v276
    %320 = vmatpush.msra.mxu0 %v274
    %321 = vmatpush.msra.mxu0 %v272
    %322 = vmatpush.msra.mxu0 %v270
    %323 = vmatpush.msra.mxu0 %v268
    %324 = vmatpush.msra.mxu0 %v266
    %325 = vmatpush.msra.mxu0 %v264
    %326 = vmatpush.msra.mxu0 %v262
    %327 = vmatpush.msra.mxu0 %v260
    %328 = vmatpush.msra.mxu0 %v258
    %329 = vmatpush.msra.mxu0 %v256
    %330 = vmatpush.msra.mxu0 %v254
    %331 = vmatpush.msra.mxu0 %v252
    %332 = vmatpush.msra.mxu0 %v250
    %333 = vmatpush.msra.mxu0 %v248
    %334 = vmatmul.f32.gmra.mxu0 %v244
    %v335 = vpop.f32.mrf.mxu0
    %v336 = vadd.f32 %v314, %v335
    %337 = vmatmul.f32.gmra.mxu0 %v246
    %v338 = vpop.f32.mrf.mxu0
    %v339 = vadd.f32 %v314, %v338
    %340 = vdwg.mxu0
    %341 = vmatpush.msra.mxu0 %v310
    %342 = vmatpush.msra.mxu0 %v308
    %343 = vmatpush.msra.mxu0 %v306
    %344 = vmatpush.msra.mxu0 %v304
    %345 = vmatpush.msra.mxu0 %v302
    %346 = vmatpush.msra.mxu0 %v300
    %347 = vmatpush.msra.mxu0 %v298
    %348 = vmatpush.msra.mxu0 %v296
    %349 = vmatpush.msra.mxu0 %v294
    %350 = vmatpush.msra.mxu0 %v292
    %351 = vmatpush.msra.mxu0 %v290
    %352 = vmatpush.msra.mxu0 %v288
    %353 = vmatpush.msra.mxu0 %v286
    %354 = vmatpush.msra.mxu0 %v284
    %355 = vmatpush.msra.mxu0 %v282
    %356 = vmatpush.msra.mxu0 %v280
    %357 = vmatmul.f32.gmra.mxu0 %v245
    %v358 = vpop.f32.mrf.mxu0
    %v359 = vadd.f32 %v336, %v358
    %360 = vmatmul.f32.gmra.mxu0 %v247
    %v361 = vpop.f32.mrf.mxu0
    %v362 = vadd.f32 %v339, %v361
    %363 = vdwg.mxu0
    %364 = vmatpush.msra.mxu0 %v279
    %365 = vmatpush.msra.mxu0 %v277
    %366 = vmatpush.msra.mxu0 %v275
    %367 = vmatpush.msra.mxu0 %v273
    %368 = vmatpush.msra.mxu0 %v271
    %369 = vmatpush.msra.mxu0 %v269
    %370 = vmatpush.msra.mxu0 %v267
    %371 = vmatpush.msra.mxu0 %v265
    %372 = vmatpush.msra.mxu0 %v263
    %373 = vmatpush.msra.mxu0 %v261
    %374 = vmatpush.msra.mxu0 %v259
    %375 = vmatpush.msra.mxu0 %v257
    %376 = vmatpush.msra.mxu0 %v255
    %377 = vmatpush.msra.mxu0 %v253
    %378 = vmatpush.msra.mxu0 %v251
    %379 = vmatpush.msra.mxu0 %v249
    %380 = vmatmul.f32.gmra.mxu0 %v244
    %v381 = vpop.f32.mrf.mxu0
    %v382 = vadd.f32 %v315, %v381
    %383 = vmatmul.f32.gmra.mxu0 %v246
    %v384 = vpop.f32.mrf.mxu0
    %v385 = vadd.f32 %v315, %v384
    %386 = vdwg.mxu0
    %387 = vmatpush.msra.mxu0 %v311
    %388 = vmatpush.msra.mxu0 %v309
    %389 = vmatpush.msra.mxu0 %v307
    %390 = vmatpush.msra.mxu0 %v305
    %391 = vmatpush.msra.mxu0 %v303
    %392 = vmatpush.msra.mxu0 %v301
    %393 = vmatpush.msra.mxu0 %v299
    %394 = vmatpush.msra.mxu0 %v297
    %395 = vmatpush.msra.mxu0 %v295
    %396 = vmatpush.msra.mxu0 %v293
    %397 = vmatpush.msra.mxu0 %v291
    %398 = vmatpush.msra.mxu0 %v289
    %399 = vmatpush.msra.mxu0 %v287
    %400 = vmatpush.msra.mxu0 %v285
    %401 = vmatpush.msra.mxu0 %v283
    %402 = vmatpush.msra.mxu0 %v281
    %403 = vmatmul.f32.gmra.mxu0 %v245
    %v404 = vpop.f32.mrf.mxu0
    %v405 = vadd.f32 %v382, %v404
    %406 = vmatmul.f32.gmra.mxu0 %v247
    %v407 = vpop.f32.mrf.mxu0
    %v408 = vadd.f32 %v385, %v407
    %409 = vdwg.mxu0
    %410 = vst [vmem:[#allocation10] sm:$0xff] %v359
    %411 = vst [vmem:[#allocation10 + $0x8] sm:$0xff] %v405
    %412 = vst [vmem:[#allocation10 + $0x10] sm:$0xff] %v362
    %413 = vst [vmem:[#allocation10 + $0x18] sm:$0xff] %v408
    // Predicated region
    $region38: #{tpu_custom_call.1} parent=1 // pred_check
      _
    $region39: #{tpu_custom_call.1} parent=1 // pred_check_branch
      %415 = sbr.rel (0) target = $region41
    $region40: #{tpu_custom_call.1} parent=1 // pred_region
      %417 = vsyncadd [#allocation4], 0
      %s418 = sshll.u32 [#allocation10], 4
      %s419 = int_to_ptr.vmem [resolvable:$true] %s418
      %s420 = sshll.u32 %s5, 4
      %s421 = int_to_ptr.hbm [resolvable:$true] %s420
      %426 = dma.vmem_to_hbm [thread:$0]  %s419, 512, %s421, [#allocation4], 256, 256, 16
    $region41: #{tpu_custom_call.1} parent=1 // pred_fallthru
      _
    // Predicated region
    $region42: #{tpu_custom_call.1} parent=1 // pred_check
      _
    $region43: #{tpu_custom_call.1} parent=1 // pred_check_branch
      %428 = sbr.rel (0) target = $region45
    $region44: #{tpu_custom_call.1} parent=1 // pred_region
      %430 = dma.done [#allocation4], 512
    $region45: #{tpu_custom_call.1} parent=1 // pred_fallthru
      _
    %431 = vsyncpa [#allocation3], 1
    %432 = vsyncpa [#allocation6], 1
    %433 = vsyncpa [#allocation9], 1
    %434 = vsyncpa [#allocation4], 1

</llo_original>
